<compile_context>
chip_gen: v7x
topology: tpu7x:2x2x1
jax: 0.10.0
libtpu: 0.0.40
codegen_flags: <defaults>
</compile_context>

<pallas_src>
import functools

import jax
import jax.numpy as jnp
from jax import lax
from jax.experimental import pallas as pl
from jax.experimental.pallas import tpu as pltpu


DIM_X = 2
DIM_Z = 2
FEAT = DIM_X + DIM_Z   # 4
HIDDEN = 32

# Rough per-batch-column VMEM footprint (f32, feature-major):
#   double-buffered (4->8, tb) input + (2->8, tb) output blocks  ~ 128 B
#   live (32, tb) pre-activation / activation intermediates      ~ 256 B
#   small (1, tb)/(2, tb) temporaries                            ~  64 B
_BYTES_PER_COL = 512
_DEFAULT_TILE = 32768      # amortizes the ~0.35 us (~600 cycle) grid-step overhead


def _round_up(n, m):
    return (n + m - 1) // m * m


def _vmem_budget_bytes():
    """Generation-aware VMEM budget (~75% of physical, conservative fallback)."""
    try:
        cap = int(pltpu.get_tpu_info().vmem_capacity_bytes)   # 64 MiB v7x, 128 MiB v5e/v6e
    except Exception:
        cap = 64 << 20                                        # v7x-sized safe fallback
    return int(min(cap - cap // 4, 100 << 20))                # 48 MiB v7x, 96 MiB v5e/v6e


def _pick_tile(batch, tile_b, vmem_budget):
    """Lane-axis tile: as large as VMEM allows, but >=2 grid steps when possible."""
    b128 = _round_up(max(batch, 1), 128)
    vmem_cap = max(128, ((vmem_budget - (2 << 20)) // _BYTES_PER_COL) // 128 * 128)
    tb = _DEFAULT_TILE if tile_b is None else int(tile_b)
    tb = max(128, min(_round_up(tb, 128), vmem_cap))
    # Keep >=2 grid steps when there is enough work: shards the "parallel" axis across
    # v7x's two TensorCores and lets the BlockSpec pipeline overlap DMA with compute.
    tb = min(tb, max(128, _round_up(pl.cdiv(b128, 2), 128)))
    return tb


def _greybox_kernel(xz_ref,               # VMEM (FEAT, TB)   rows = [v_in, i_out, v_out, i_in]
                    coef_ref,             # SMEM (3,)         [1/Rp, 1/L, R/L]
                    w1_ref, b1_ref,       # VMEM (H, FEAT), (H, 1)
                    w2_ref, b2_ref,       # VMEM (H, H),    (H, 1)
                    w3n_ref, b3n_ref,     # VMEM (1, H),    (1, 1)   (pre-negated)
                    out_ref):             # VMEM (DIM_Z, TB)
    xz = xz_ref[...]                                                       # (4, TB) f32

    # term-NN: -log(C) per column (w3/b3 were negated wrapper-side).
    h = jnp.tanh(jnp.dot(w1_ref[...], xz,
                         preferred_element_type=jnp.float32) + b1_ref[...])   # (H, TB)
    h = jnp.tanh(jnp.dot(w2_ref[...], h,
                         preferred_element_type=jnp.float32) + b2_ref[...])   # (H, TB)
    neg_logc = jnp.dot(w3n_ref[...], h,
                       preferred_element_type=jnp.float32) + b3n_ref[...]     # (1, TB)
    inv_c = jnp.exp(neg_logc)      # 1/C = exp(-logC): single EUP exp, no negate/divide

    # Physics on the VPU in exact f32 (no extra tiny-MXU round trip).
    inv_rp = coef_ref[0]           # 1/Rp
    inv_l = coef_ref[1]            # 1/L
    r_over_l = coef_ref[2]         # R/L
    v_in, i_out = xz[0:1, :], xz[1:2, :]
    v_out, i_in = xz[2:3, :], xz[3:4, :]
    d_v_out = (i_in - i_out - v_out * inv_rp) * inv_c                      # (1, TB)
    d_i_in = (v_in - v_out) * inv_l - i_in * r_over_l                      # (1, TB)

    # Single lane-dense (2, TB) store: row 0 = d_v_out/dt, row 1 = d_i_in/dt.
    row = lax.broadcasted_iota(jnp.int32, (DIM_Z, 1), 0)
    out_ref[...] = jnp.where(row == 0, d_v_out, d_i_in)


@functools.partial(jax.jit, static_argnames=("tile_b",))
def greybox_ode1_forward(log_params, x, z, w1, b1, w2, b2, w3, b3, *, tile_b=None):
    """Pallas-accelerated GreyboxODE1 forward (x passed explicitly).

    log_params = [log L, log R, log Rp]; x, z are (B, 2); MLP weights stored
    (in_features, out_features), biases (out_features,). Returns z_dot (B, 2).
    """
    B = z.shape[0]
    vmem_budget = _vmem_budget_bytes()
    tb = _pick_tile(B, tile_b, vmem_budget)
    b_pad = _round_up(B, tb)
    grid = (b_pad // tb,)

    # exp(log L/R/Rp) once in the wrapper; pass the three physics scalars via SMEM.
    inv_l = jnp.exp(-log_params[0])
    r_over_l = jnp.exp(log_params[1] - log_params[0])
    inv_rp = jnp.exp(-log_params[2])
    coef = jnp.stack([inv_rp, inv_l, r_over_l]).astype(jnp.float32)        # (3,)

    # One fused concat+pad+transpose into feature-major (4, b_pad): batch on the lanes.
    xz = jnp.concatenate([x, z], axis=-1).astype(jnp.float32)              # (B, 4)
    if b_pad != B:
        xz = jnp.pad(xz, ((0, b_pad - B), (0, 0)))
    xz_fm = xz.T                                                            # (4, b_pad)

    def lane_spec(shape):
        return pl.BlockSpec(shape, lambda i: (0, i))

    def const_spec(shape):
        return pl.BlockSpec(shape, lambda i: (0, 0))    # weights stay VMEM-resident

    out_fm = pl.pallas_call(
        _greybox_kernel,
        out_shape=jax.ShapeDtypeStruct((DIM_Z, b_pad), jnp.float32),
        grid=grid,
        in_specs=[
            lane_spec((FEAT, tb)),
            pl.BlockSpec(memory_space=pltpu.MemorySpace.SMEM),
            const_spec((HIDDEN, FEAT)), const_spec((HIDDEN, 1)),
            const_spec((HIDDEN, HIDDEN)), const_spec((HIDDEN, 1)),
            const_spec((1, HIDDEN)), const_spec((1, 1)),
        ],
        out_specs=lane_spec((DIM_Z, tb)),
        compiler_params=pltpu.CompilerParams(
            dimension_semantics=("parallel",),
            vmem_limit_bytes=vmem_budget),
    )(xz_fm, coef,
      w1.T.astype(jnp.float32), b1.reshape(HIDDEN, 1).astype(jnp.float32),
      w2.T.astype(jnp.float32), b2.reshape(HIDDEN, 1).astype(jnp.float32),
      (-w3.T).astype(jnp.float32), (-b3).reshape(1, 1).astype(jnp.float32))

    # (2, b_pad) feature-major -> (B, 2) batch-major (cheap final transpose).
    return out_fm[:, :B].T


def _init_linear(key, fan_in, fan_out):
    """PyTorch-style Linear init: U(-1/sqrt(fan_in), 1/sqrt(fan_in))."""
    kw, kb = jax.random.split(key)
    bound = 1.0 / jnp.sqrt(jnp.float32(fan_in))
    w = jax.random.uniform(kw, (fan_in, fan_out), jnp.float32, -bound, bound)
    b = jax.random.uniform(kb, (fan_out,), jnp.float32, -bound, bound)
    return w, b


def _reference_forward(log_params, x, z, w1, b1, w2, b2, w3, b3):
    """Pure-JAX f32 reference mirroring the PyTorch GreyboxODE1 forward."""
    hp = lax.Precision.HIGHEST    # faithful to PyTorch's full-f32 matmuls
    L = jnp.exp(log_params[0])
    R = jnp.exp(log_params[1])
    Rp = jnp.exp(log_params[2])
    v_in, i_out = x[..., 0], x[..., 1]
    v_out, i_in = z[..., 0], z[..., 1]
    xz = jnp.concatenate([x, z], axis=-1)
    h = jnp.tanh(jnp.dot(xz, w1, precision=hp) + b1)
    h = jnp.tanh(jnp.dot(h, w2, precision=hp) + b2)
    c = jnp.exp((jnp.dot(h, w3, precision=hp) + b3)[..., 0])
    d_v_out_dt = (i_in - i_out - v_out / Rp) / c
    d_i_in_dt = (v_in - R * i_in - v_out) / L
    return jnp.stack([d_v_out_dt, d_i_in_dt], axis=-1)


if __name__ == "__main__":
    key = jax.random.PRNGKey(0)
    k_x, k_z, k1, k2, k3 = jax.random.split(key, 5)

    # Physics parameters stored as logs, as in the PyTorch module defaults.
    L0, R0, Rp0 = 1 * 0.001, 10 * 0.01, 1 * 1e9
    log_params = jnp.log(jnp.array([L0, R0, Rp0], dtype=jnp.float32))

    # self.C: Linear(4->32) -> Tanh -> Linear(32->32) -> Tanh -> Linear(32->1)
    w1, b1 = _init_linear(k1, FEAT, HIDDEN)
    w2, b2 = _init_linear(k2, HIDDEN, HIDDEN)
    w3, b3 = _init_linear(k3, HIDDEN, 1)

    # B=8: single-tile path; B=300: padded, 2-step grid path.
    for B in (8, 300):
        x = jax.random.normal(jax.random.fold_in(k_x, B), (B, DIM_X), jnp.float32)
        z = jax.random.normal(jax.random.fold_in(k_z, B), (B, DIM_Z), jnp.float32)

        out = jax.block_until_ready(
            greybox_ode1_forward(log_params, x, z, w1, b1, w2, b2, w3, b3))
        ref = _reference_forward(log_params, x, z, w1, b1, w2, b2, w3, b3)

        assert out.shape == (B, DIM_Z)
        # The MLP matmuls ride the MXU at default precision; rtol covers possible
        # bf16-input rounding vs the full-f32 reference. Physics path is exact f32.
        assert jnp.allclose(out, ref, rtol=5e-3, atol=1e-3), (
            B, float(jnp.max(jnp.abs(out - ref))))

    # TODO(synk): get_current_x (nearest-time-index gather over a stored (B, T, 2)
    # trajectory) is host/integrator-side glue in the PyTorch module and is not part
    # of this kernel; x is passed in explicitly.
    print("KERNEL_OK")
</pallas_src>

<mosaic_0001>
module attributes {stable_mosaic.version = 11 : i64} {
  func.func @_greybox_kernel(%arg0: i32, %arg1: memref<4x128xf32, #tpu.memory_space<vmem>>, %arg2: memref<3xf32, #tpu.memory_space<smem>>, %arg3: memref<32x4xf32, #tpu.memory_space<vmem>>, %arg4: memref<32x1xf32, #tpu.memory_space<vmem>>, %arg5: memref<32x32xf32, #tpu.memory_space<vmem>>, %arg6: memref<32x1xf32, #tpu.memory_space<vmem>>, %arg7: memref<1x32xf32, #tpu.memory_space<vmem>>, %arg8: memref<1x1xf32, #tpu.memory_space<vmem>>, %arg9: memref<2x128xf32, #tpu.memory_space<vmem>>) attributes {dimension_semantics = [#tpu.dimension_semantics<parallel>], iteration_bounds = array<i64: 1>, scalar_prefetch = 0 : i64, scratch_operands = 0 : i64, tpu.core_type = #tpu.core_type<tc>, window_params = [{transform_indices = @transform_0, window_bounds = array<i64: 4, 128>}, {transform_indices = @transform_1, window_bounds = array<i64: 3>}, {pipeline_mode = #tpu.pipeline_mode<synchronous>, transform_indices = @transform_2, window_bounds = array<i64: 32, 4>}, {pipeline_mode = #tpu.pipeline_mode<synchronous>, transform_indices = @transform_3, window_bounds = array<i64: 32, 1>}, {pipeline_mode = #tpu.pipeline_mode<synchronous>, transform_indices = @transform_4, window_bounds = array<i64: 32, 32>}, {pipeline_mode = #tpu.pipeline_mode<synchronous>, transform_indices = @transform_5, window_bounds = array<i64: 32, 1>}, {pipeline_mode = #tpu.pipeline_mode<synchronous>, transform_indices = @transform_6, window_bounds = array<i64: 1, 32>}, {pipeline_mode = #tpu.pipeline_mode<synchronous>, transform_indices = @transform_7, window_bounds = array<i64: 1, 1>}, {transform_indices = @transform_8, window_bounds = array<i64: 2, 128>}]} {
    %c0 = arith.constant 0 : index
    %c0_0 = arith.constant 0 : index
    %0 = vector.load %arg1[%c0, %c0_0] : memref<4x128xf32, #tpu.memory_space<vmem>>, vector<4x128xf32>
    %c0_1 = arith.constant 0 : index
    %c0_2 = arith.constant 0 : index
    %1 = vector.load %arg3[%c0_1, %c0_2] : memref<32x4xf32, #tpu.memory_space<vmem>>, vector<32x4xf32>
    %cst = arith.constant dense<0.000000e+00> : vector<32x128xf32>
    %2 = tpu.matmul %1, %0, %cst {dimension_numbers = #tpu.dot_dimension_numbers<[1], [0], [0], [1], [0, 0, 1, 1], [], []>} : vector<32x4xf32>, vector<4x128xf32>, vector<32x128xf32> -> vector<32x128xf32>
    %c0_3 = arith.constant 0 : index
    %c0_4 = arith.constant 0 : index
    %3 = vector.load %arg4[%c0_3, %c0_4] : memref<32x1xf32, #tpu.memory_space<vmem>>, vector<32x1xf32>
    %4 = vector.broadcast %3 : vector<32x1xf32> to vector<32x128xf32>
    %5 = arith.addf %2, %4 : vector<32x128xf32>
    %6 = math.tanh %5 : vector<32x128xf32>
    %c0_5 = arith.constant 0 : index
    %c0_6 = arith.constant 0 : index
    %7 = vector.load %arg5[%c0_5, %c0_6] : memref<32x32xf32, #tpu.memory_space<vmem>>, vector<32x32xf32>
    %cst_7 = arith.constant dense<0.000000e+00> : vector<32x128xf32>
    %8 = tpu.matmul %7, %6, %cst_7 {dimension_numbers = #tpu.dot_dimension_numbers<[1], [0], [0], [1], [0, 0, 1, 1], [], []>} : vector<32x32xf32>, vector<32x128xf32>, vector<32x128xf32> -> vector<32x128xf32>
    %c0_8 = arith.constant 0 : index
    %c0_9 = arith.constant 0 : index
    %9 = vector.load %arg6[%c0_8, %c0_9] : memref<32x1xf32, #tpu.memory_space<vmem>>, vector<32x1xf32>
    %10 = vector.broadcast %9 : vector<32x1xf32> to vector<32x128xf32>
    %11 = arith.addf %8, %10 : vector<32x128xf32>
    %12 = math.tanh %11 : vector<32x128xf32>
    %c0_10 = arith.constant 0 : index
    %c0_11 = arith.constant 0 : index
    %13 = vector.load %arg7[%c0_10, %c0_11] : memref<1x32xf32, #tpu.memory_space<vmem>>, vector<1x32xf32>
    %cst_12 = arith.constant dense<0.000000e+00> : vector<1x128xf32>
    %14 = tpu.matmul %13, %12, %cst_12 {dimension_numbers = #tpu.dot_dimension_numbers<[1], [0], [0], [1], [0, 0, 1, 1], [], []>} : vector<1x32xf32>, vector<32x128xf32>, vector<1x128xf32> -> vector<1x128xf32>
    %c0_13 = arith.constant 0 : index
    %c0_14 = arith.constant 0 : index
    %15 = vector.load %arg8[%c0_13, %c0_14] : memref<1x1xf32, #tpu.memory_space<vmem>>, vector<1x1xf32>
    %16 = vector.broadcast %15 : vector<1x1xf32> to vector<1x128xf32>
    %17 = arith.addf %14, %16 : vector<1x128xf32>
    %18 = math.exp %17 : vector<1x128xf32>
    %c0_15 = arith.constant 0 : index
    %19 = memref.load %arg2[%c0_15] : memref<3xf32, #tpu.memory_space<smem>>
    %c1 = arith.constant 1 : index
    %20 = memref.load %arg2[%c1] : memref<3xf32, #tpu.memory_space<smem>>
    %c2 = arith.constant 2 : index
    %21 = memref.load %arg2[%c2] : memref<3xf32, #tpu.memory_space<smem>>
    %22 = vector.extract_strided_slice %0 {offsets = [0, 0], sizes = [1, 128], strides = [1, 1]} : vector<4x128xf32> to vector<1x128xf32>
    %23 = vector.extract_strided_slice %0 {offsets = [1, 0], sizes = [1, 128], strides = [1, 1]} : vector<4x128xf32> to vector<1x128xf32>
    %24 = vector.extract_strided_slice %0 {offsets = [2, 0], sizes = [1, 128], strides = [1, 1]} : vector<4x128xf32> to vector<1x128xf32>
    %25 = vector.extract_strided_slice %0 {offsets = [3, 0], sizes = [1, 128], strides = [1, 1]} : vector<4x128xf32> to vector<1x128xf32>
    %26 = arith.subf %25, %23 : vector<1x128xf32>
    %27 = vector.broadcast %19 : f32 to vector<1x128xf32>
    %28 = arith.mulf %24, %27 : vector<1x128xf32>
    %29 = arith.subf %26, %28 : vector<1x128xf32>
    %30 = arith.mulf %29, %18 : vector<1x128xf32>
    %31 = arith.subf %22, %24 : vector<1x128xf32>
    %32 = vector.broadcast %20 : f32 to vector<1x128xf32>
    %33 = arith.mulf %31, %32 : vector<1x128xf32>
    %34 = vector.broadcast %21 : f32 to vector<1x128xf32>
    %35 = arith.mulf %25, %34 : vector<1x128xf32>
    %36 = arith.subf %33, %35 : vector<1x128xf32>
    %37 = tpu.iota {dimensions = array<i32: 0>} : vector<2x1xi32>
    %c0_i32 = arith.constant 0 : i32
    %38 = vector.broadcast %c0_i32 : i32 to vector<2x1xi32>
    %39 = arith.cmpi eq, %37, %38 : vector<2x1xi32>
    %40 = vector.shape_cast %39 : vector<2x1xi1> to vector<2x1xi1>
    %41 = vector.broadcast %40 : vector<2x1xi1> to vector<2x128xi1>
    %42 = vector.shape_cast %30 : vector<1x128xf32> to vector<1x128xf32>
    %43 = vector.broadcast %42 : vector<1x128xf32> to vector<2x128xf32>
    %44 = vector.shape_cast %36 : vector<1x128xf32> to vector<1x128xf32>
    %45 = vector.broadcast %44 : vector<1x128xf32> to vector<2x128xf32>
    %46 = arith.select %41, %43, %45 : vector<2x128xi1>, vector<2x128xf32>
    %c0_16 = arith.constant 0 : index
    %c0_17 = arith.constant 0 : index
    %47 = vector.load %arg9[%c0_16, %c0_17] : memref<2x128xf32, #tpu.memory_space<vmem>>, vector<2x128xf32>
    tpu.vector_store %arg9[%c0_16, %c0_17], %46 {strides = array<i32>} : memref<2x128xf32, #tpu.memory_space<vmem>>, vector<2x128xf32>,
    return
  }
  func.func @transform_0(%arg0: i32) -> (i32, i32) {
    %c0_i32 = arith.constant 0 : i32
    %c0_i32_0 = arith.constant 0 : i32
    return %c0_i32, %arg0 : i32, i32
  }
  func.func @transform_1(%arg0: i32) -> i32 {
    %c0_i32 = arith.constant 0 : i32
    %c0_i32_0 = arith.constant 0 : i32
    return %c0_i32 : i32
  }
  func.func @transform_2(%arg0: i32) -> (i32, i32) {
    %c0_i32 = arith.constant 0 : i32
    %c0_i32_0 = arith.constant 0 : i32
    %c0_i32_1 = arith.constant 0 : i32
    return %c0_i32, %c0_i32_0 : i32, i32
  }
  func.func @transform_3(%arg0: i32) -> (i32, i32) {
    %c0_i32 = arith.constant 0 : i32
    %c0_i32_0 = arith.constant 0 : i32
    %c0_i32_1 = arith.constant 0 : i32
    return %c0_i32, %c0_i32_0 : i32, i32
  }
  func.func @transform_4(%arg0: i32) -> (i32, i32) {
    %c0_i32 = arith.constant 0 : i32
    %c0_i32_0 = arith.constant 0 : i32
    %c0_i32_1 = arith.constant 0 : i32
    return %c0_i32, %c0_i32_0 : i32, i32
  }
  func.func @transform_5(%arg0: i32) -> (i32, i32) {
    %c0_i32 = arith.constant 0 : i32
    %c0_i32_0 = arith.constant 0 : i32
    %c0_i32_1 = arith.constant 0 : i32
    return %c0_i32, %c0_i32_0 : i32, i32
  }
  func.func @transform_6(%arg0: i32) -> (i32, i32) {
    %c0_i32 = arith.constant 0 : i32
    %c0_i32_0 = arith.constant 0 : i32
    %c0_i32_1 = arith.constant 0 : i32
    return %c0_i32, %c0_i32_0 : i32, i32
  }
  func.func @transform_7(%arg0: i32) -> (i32, i32) {
    %c0_i32 = arith.constant 0 : i32
    %c0_i32_0 = arith.constant 0 : i32
    %c0_i32_1 = arith.constant 0 : i32
    return %c0_i32, %c0_i32_0 : i32, i32
  }
  func.func @transform_8(%arg0: i32) -> (i32, i32) {
    %c0_i32 = arith.constant 0 : i32
    %c0_i32_0 = arith.constant 0 : i32
    return %c0_i32, %arg0 : i32, i32
  }
}

</mosaic_0001>

<llo_original>
// kernel: greybox_ode1_forward.1
$region0: #{greybox_ode1_forward.1}
  #allocation0 [shape = 'u32[]', space=smem, size = 0x4, offset = 0x4, fixed_abs, tag = 'smem constant byte address 0x4 - core index']
  #allocation1 [shape = 'u32[144,128]{1,0:T(1,128)}', space=vmem, size = 0x12000, scoped, tag = 'internal scratch']
  #allocation2 [shape = 'f32[1,1]{1,0:T(1,128)S(1)}', space=vmem, size = 0x200, scoped, tag = 'scoped memory for greybox_ode1_forward.1']
  %s0 = inlined_call_operand.vmem [shape: f32[4,128], index: 0, kind: input, shape index: {}]
  %s1 = inlined_call_operand.vmem [shape: f32[3], index: 1, kind: input, shape index: {}]
  %s2 = inlined_call_operand.vmem [shape: f32[32,4], index: 2, kind: input, shape index: {}]
  %s3 = inlined_call_operand.vmem [shape: f32[32,1], index: 3, kind: input, shape index: {}]
  %s4 = inlined_call_operand.vmem [shape: f32[32,32], index: 4, kind: input, shape index: {}]
  %s5 = inlined_call_operand.vmem [shape: f32[32,1], index: 5, kind: input, shape index: {}]
  %s6 = inlined_call_operand.vmem [shape: f32[1,32], index: 6, kind: input, shape index: {}]
  %s7 = inlined_call_operand.<no memory space> [shape: f32[1,1], index: 7, kind: input, shape index: {}]
  %s8 = inlined_call_operand.vmem [shape: f32[2,128], index: 8, kind: output, shape index: {}]
  %s9 = sld [smem:[#allocation0]]
  $region46: #{greybox_ode1_forward.1} parent=0
    _
  %s11 = ssub.s32 1, %s9
  %s12 = scalar_select 0, %s11, %s9
  %v13 = vstv %s7
  %14 = vst [vmem:[#allocation2] sm:$0x1] %v13
  $region1: #{greybox_ode1_forward.1} parent=0
    #allocation3 [shape = 'u8[512]{0}', space=smem, size = 0x200, scoped, tag = 'input window, operand 1, single buffered']
    #allocation4 [shape = 's32[1]{0}', space=sflag, size = 0x4, scoped, tag = 'scoped memory for greybox_ode1_forward.1']
    %15 = vsyncpa [#allocation4], 0
    // Predicated region
    $region2: #{greybox_ode1_forward.1} parent=1 // pred_check
      _
    $region3: #{greybox_ode1_forward.1} parent=1 // pred_check_branch
      %17 = sbr.rel (0) target = $region5
    $region4: #{greybox_ode1_forward.1} parent=1 // pred_region
      _
    $region5: #{greybox_ode1_forward.1} parent=1 // pred_fallthru
      _
    // Predicated region
    $region6: #{greybox_ode1_forward.1} parent=1 // pred_check
      _
    $region7: #{greybox_ode1_forward.1} parent=1 // pred_check_branch
      %19 = sbr.rel (0) target = $region9
    $region8: #{greybox_ode1_forward.1} parent=1 // pred_region
      %s21 = ssub.s32 16, 16
      %22 = vsyncadd [#allocation4], %s21
      %s24 = sshll.u32 %s1, 4
      %s25 = int_to_ptr.vmem [resolvable:$true] %s24
      %27 = dma.vmem_to_smem %s25, 16, [#allocation3], [#allocation4]
    $region9: #{greybox_ode1_forward.1} parent=1 // pred_fallthru
      _
    // Predicated region
    $region10: #{greybox_ode1_forward.1} parent=1 // pred_check
      _
    $region11: #{greybox_ode1_forward.1} parent=1 // pred_check_branch
      %29 = sbr.rel (0) target = $region13
    $region12: #{greybox_ode1_forward.1} parent=1 // pred_region
      _
    $region13: #{greybox_ode1_forward.1} parent=1 // pred_fallthru
      _
    // Predicated region
    $region14: #{greybox_ode1_forward.1} parent=1 // pred_check
      _
    $region15: #{greybox_ode1_forward.1} parent=1 // pred_check_branch
      %31 = sbr.rel (0) target = $region17
    $region16: #{greybox_ode1_forward.1} parent=1 // pred_region
      _
    $region17: #{greybox_ode1_forward.1} parent=1 // pred_fallthru
      _
    // Predicated region
    $region18: #{greybox_ode1_forward.1} parent=1 // pred_check
      _
    $region19: #{greybox_ode1_forward.1} parent=1 // pred_check_branch
      %33 = sbr.rel (0) target = $region21
    $region20: #{greybox_ode1_forward.1} parent=1 // pred_region
      _
    $region21: #{greybox_ode1_forward.1} parent=1 // pred_fallthru
      _
    // Predicated region
    $region22: #{greybox_ode1_forward.1} parent=1 // pred_check
      _
    $region23: #{greybox_ode1_forward.1} parent=1 // pred_check_branch
      %35 = sbr.rel (0) target = $region25
    $region24: #{greybox_ode1_forward.1} parent=1 // pred_region
      _
    $region25: #{greybox_ode1_forward.1} parent=1 // pred_fallthru
      _
    // Predicated region
    $region26: #{greybox_ode1_forward.1} parent=1 // pred_check
      _
    $region27: #{greybox_ode1_forward.1} parent=1 // pred_check_branch
      %37 = sbr.rel (0) target = $region29
    $region28: #{greybox_ode1_forward.1} parent=1 // pred_region
      _
    $region29: #{greybox_ode1_forward.1} parent=1 // pred_fallthru
      _
    // Predicated region
    $region30: #{greybox_ode1_forward.1} parent=1 // pred_check
      _
    $region31: #{greybox_ode1_forward.1} parent=1 // pred_check_branch
      %39 = sbr.rel (0) target = $region33
    $region32: #{greybox_ode1_forward.1} parent=1 // pred_region
      _
    $region33: #{greybox_ode1_forward.1} parent=1 // pred_fallthru
      _
    // Predicated region
    $region34: #{greybox_ode1_forward.1} parent=1 // pred_check
      _
    $region35: #{greybox_ode1_forward.1} parent=1 // pred_check_branch
      %41 = sbr.rel (0) target = $region37
    $region36: #{greybox_ode1_forward.1} parent=1 // pred_region
      %42 = dma.done [#allocation4], 16
    $region37: #{greybox_ode1_forward.1} parent=1 // pred_fallthru
      _
    %43 = sfence
    %v44 = vld [vmem:[%s0] sm:$0xf]
    %v45 = vld [vmem:[%s2] sm:$0xff]
    %v46 = vld [vmem:[%s2 + $0x8] sm:$0xff]
    %v47 = vld [vmem:[%s2 + $0x10] sm:$0xff]
    %v48 = vld [vmem:[%s2 + $0x18] sm:$0xff]
    %v49 = vld [vmem:[%s3] sm:$0xff]
    %v50 = vld [vmem:[%s3 + $0x8] sm:$0xff]
    %v51 = vld [vmem:[%s3 + $0x10] sm:$0xff]
    %v52 = vld [vmem:[%s3 + $0x18] sm:$0xff]
    %54 = vset.pattern.permute.xlu0 0
    %55 = vperm.xlu0 %54, %v49
    %v56 = vpop.permute.xlu0 %55
    %59 = vset.pattern.permute.xlu0 0
    %60 = vperm.xlu0 %59, %v50
    %v61 = vpop.permute.xlu0 %60
    %64 = vset.pattern.permute.xlu0 0
    %65 = vperm.xlu0 %64, %v51
    %v66 = vpop.permute.xlu0 %65
    %69 = vset.pattern.permute.xlu0 0
    %70 = vperm.xlu0 %69, %v52
    %v71 = vpop.permute.xlu0 %70
    %vm73 = vcmask 31744
    %v75 = vsel %vm73, %v45, 0
    %v78 = vsel %vm73, %v46, 0
    %v81 = vsel %vm73, %v47, 0
    %v84 = vsel %vm73, %v48, 0
    %vm86 = vcmask 1043456
    %v88 = vsel %vm86, %v44, 0
    %90 = vmatprep.subr.mxu0 0.0
    %91 = vmatpush1.msra.mxu0 %v88
    %92 = vmatprep.subr.mxu0 0.0
    %93 = vmatpush1.msra.mxu0 0.0
    %94 = vmatprep.subr.mxu0 0.0
    %95 = vmatpush1.msra.mxu0 0.0
    %96 = vmatprep.subr.mxu0 0.0
    %97 = vmatpush1.msra.mxu0 0.0
    %98 = vmatprep.subr.mxu0 0.0
    %99 = vmatpush1.msra.mxu0 0.0
    %100 = vmatprep.subr.mxu0 0.0
    %101 = vmatpush1.msra.mxu0 0.0
    %102 = vmatprep.subr.mxu0 0.0
    %103 = vmatpush1.msra.mxu0 0.0
    %104 = vmatprep.subr.mxu0 0.0
    %105 = vmatpush1.msra.mxu0 0.0
    %106 = vmatprep.subr.mxu0 0.0
    %107 = vmatpush1.msra.mxu0 0.0
    %108 = vmatprep.subr.mxu0 0.0
    %109 = vmatpush1.msra.mxu0 0.0
    %110 = vmatprep.subr.mxu0 0.0
    %111 = vmatpush1.msra.mxu0 0.0
    %112 = vmatprep.subr.mxu0 0.0
    %113 = vmatpush1.msra.mxu0 0.0
    %114 = vmatprep.subr.mxu0 0.0
    %115 = vmatpush1.msra.mxu0 0.0
    %116 = vmatprep.subr.mxu0 0.0
    %117 = vmatpush1.msra.mxu0 0.0
    %118 = vmatprep.subr.mxu0 0.0
    %119 = vmatpush1.msra.mxu0 0.0
    %120 = vmatprep.subr.mxu0 0.0
    %121 = vmatpush1.msra.mxu0 0.0
    %122 = vmatprep.subr.mxu0 0.0
    %123 = vmatpush1.msra.mxu0 0.0
    %124 = vmatprep.subr.mxu0 0.0
    %125 = vmatpush1.msra.mxu0 0.0
    %126 = vmatprep.subr.mxu0 0.0
    %127 = vmatpush1.msra.mxu0 0.0
    %128 = vmatprep.subr.mxu0 0.0
    %129 = vmatpush1.msra.mxu0 0.0
    %130 = vmatprep.subr.mxu0 0.0
    %131 = vmatpush1.msra.mxu0 0.0
    %132 = vmatprep.subr.mxu0 0.0
    %133 = vmatpush1.msra.mxu0 0.0
    %134 = vmatprep.subr.mxu0 0.0
    %135 = vmatpush1.msra.mxu0 0.0
    %136 = vmatprep.subr.mxu0 0.0
    %137 = vmatpush1.msra.mxu0 0.0
    %138 = vmatprep.subr.mxu0 0.0
    %139 = vmatpush1.msra.mxu0 0.0
    %140 = vmatprep.subr.mxu0 0.0
    %141 = vmatpush1.msra.mxu0 0.0
    %142 = vmatprep.subr.mxu0 0.0
    %143 = vmatpush1.msra.mxu0 0.0
    %144 = vmatprep.subr.mxu0 0.0
    %145 = vmatpush1.msra.mxu0 0.0
    %146 = vmatprep.subr.mxu0 0.0
    %147 = vmatpush1.msra.mxu0 0.0
    %148 = vmatprep.subr.mxu0 0.0
    %149 = vmatpush1.msra.mxu0 0.0
    %150 = vmatprep.subr.mxu0 0.0
    %151 = vmatpush1.msra.mxu0 0.0
    %152 = vmatprep.subr.mxu0 0.0
    %153 = vmatpush1.msra.mxu0 0.0
    %154 = vmatprep.mubr.f32.mxu0 0.0
    %155 = vmatmul.mubr.f32.gmra.mrb[0].mxu0 %v75
    %v156 = vpop.f32.mrb[0].mxu0
    %v157 = vadd.f32 %v56, %v156
    %v158 = vpop.f32.mrb[0].mxu0
    %159 = vmatprep.mubr.f32.mxu0 0.0
    %160 = vmatmul.mubr.f32.gmra.mrb[0].mxu0 %v78
    %v161 = vpop.f32.mrb[0].mxu0
    %v162 = vadd.f32 %v61, %v161
    %v163 = vpop.f32.mrb[0].mxu0
    %164 = vmatprep.mubr.f32.mxu0 0.0
    %165 = vmatmul.mubr.f32.gmra.mrb[0].mxu0 %v81
    %v166 = vpop.f32.mrb[0].mxu0
    %v167 = vadd.f32 %v66, %v166
    %v168 = vpop.f32.mrb[0].mxu0
    %169 = vmatprep.mubr.f32.mxu0 0.0
    %170 = vmatmul.mubr.f32.gmra.mrb[0].mxu0 %v84
    %v171 = vpop.f32.mrb[0].mxu0
    %v172 = vadd.f32 %v71, %v171
    %v173 = vpop.f32.mrb[0].mxu0
    %174 = vdwg.mxu0
    %v175 = vtanh.pop %v157
    %v176 = vtanh.pop %v162
    %v177 = vtanh.pop %v167
    %v178 = vtanh.pop %v172
    %v179 = vld [vmem:[%s4] sm:$0xff]
    %v180 = vld [vmem:[%s4 + $0x8] sm:$0xff]
    %v181 = vld [vmem:[%s4 + $0x10] sm:$0xff]
    %v182 = vld [vmem:[%s4 + $0x18] sm:$0xff]
    %v183 = vld [vmem:[%s5] sm:$0xff]
    %v184 = vld [vmem:[%s5 + $0x8] sm:$0xff]
    %v185 = vld [vmem:[%s5 + $0x10] sm:$0xff]
    %v186 = vld [vmem:[%s5 + $0x18] sm:$0xff]
    %188 = vset.pattern.permute.xlu0 0
    %189 = vperm.xlu0 %188, %v183
    %v190 = vpop.permute.xlu0 %189
    %193 = vset.pattern.permute.xlu0 0
    %194 = vperm.xlu0 %193, %v184
    %v195 = vpop.permute.xlu0 %194
    %198 = vset.pattern.permute.xlu0 0
    %199 = vperm.xlu0 %198, %v185
    %v200 = vpop.permute.xlu0 %199
    %203 = vset.pattern.permute.xlu0 0
    %204 = vperm.xlu0 %203, %v186
    %v205 = vpop.permute.xlu0 %204
    %vm207 = vcmask 261120
    %v209 = vsel %vm207, %v179, 0
    %v212 = vsel %vm207, %v180, 0
    %v215 = vsel %vm207, %v181, 0
    %v218 = vsel %vm207, %v182, 0
    %220 = vmatprep.subr.mxu0 0.0
    %221 = vmatpush1.msra.mxu0 %v175
    %222 = vmatprep.subr.mxu0 0.0
    %223 = vmatpush1.msra.mxu0 %v176
    %224 = vmatprep.subr.mxu0 0.0
    %225 = vmatpush1.msra.mxu0 %v177
    %226 = vmatprep.subr.mxu0 0.0
    %227 = vmatpush1.msra.mxu0 %v178
    %228 = vmatprep.subr.mxu0 0.0
    %229 = vmatpush1.msra.mxu0 0.0
    %230 = vmatprep.subr.mxu0 0.0
    %231 = vmatpush1.msra.mxu0 0.0
    %232 = vmatprep.subr.mxu0 0.0
    %233 = vmatpush1.msra.mxu0 0.0
    %234 = vmatprep.subr.mxu0 0.0
    %235 = vmatpush1.msra.mxu0 0.0
    %236 = vmatprep.subr.mxu0 0.0
    %237 = vmatpush1.msra.mxu0 0.0
    %238 = vmatprep.subr.mxu0 0.0
    %239 = vmatpush1.msra.mxu0 0.0
    %240 = vmatprep.subr.mxu0 0.0
    %241 = vmatpush1.msra.mxu0 0.0
    %242 = vmatprep.subr.mxu0 0.0
    %243 = vmatpush1.msra.mxu0 0.0
    %244 = vmatprep.subr.mxu0 0.0
    %245 = vmatpush1.msra.mxu0 0.0
    %246 = vmatprep.subr.mxu0 0.0
    %247 = vmatpush1.msra.mxu0 0.0
    %248 = vmatprep.subr.mxu0 0.0
    %249 = vmatpush1.msra.mxu0 0.0
    %250 = vmatprep.subr.mxu0 0.0
    %251 = vmatpush1.msra.mxu0 0.0
    %252 = vmatprep.subr.mxu0 0.0
    %253 = vmatpush1.msra.mxu0 0.0
    %254 = vmatprep.subr.mxu0 0.0
    %255 = vmatpush1.msra.mxu0 0.0
    %256 = vmatprep.subr.mxu0 0.0
    %257 = vmatpush1.msra.mxu0 0.0
    %258 = vmatprep.subr.mxu0 0.0
    %259 = vmatpush1.msra.mxu0 0.0
    %260 = vmatprep.subr.mxu0 0.0
    %261 = vmatpush1.msra.mxu0 0.0
    %262 = vmatprep.subr.mxu0 0.0
    %263 = vmatpush1.msra.mxu0 0.0
    %264 = vmatprep.subr.mxu0 0.0
    %265 = vmatpush1.msra.mxu0 0.0
    %266 = vmatprep.subr.mxu0 0.0
    %267 = vmatpush1.msra.mxu0 0.0
    %268 = vmatprep.subr.mxu0 0.0
    %269 = vmatpush1.msra.mxu0 0.0
    %270 = vmatprep.subr.mxu0 0.0
    %271 = vmatpush1.msra.mxu0 0.0
    %272 = vmatprep.subr.mxu0 0.0
    %273 = vmatpush1.msra.mxu0 0.0
    %274 = vmatprep.subr.mxu0 0.0
    %275 = vmatpush1.msra.mxu0 0.0
    %276 = vmatprep.subr.mxu0 0.0
    %277 = vmatpush1.msra.mxu0 0.0
    %278 = vmatprep.subr.mxu0 0.0
    %279 = vmatpush1.msra.mxu0 0.0
    %280 = vmatprep.subr.mxu0 0.0
    %281 = vmatpush1.msra.mxu0 0.0
    %282 = vmatprep.subr.mxu0 0.0
    %283 = vmatpush1.msra.mxu0 0.0
    %284 = vmatprep.mubr.f32.mxu0 0.0
    %285 = vmatmul.mubr.f32.gmra.mrb[0].mxu0 %v209
    %v286 = vpop.f32.mrb[0].mxu0
    %v287 = vadd.f32 %v190, %v286
    %v288 = vpop.f32.mrb[0].mxu0
    %289 = vmatprep.mubr.f32.mxu0 0.0
    %290 = vmatmul.mubr.f32.gmra.mrb[0].mxu0 %v212
    %v291 = vpop.f32.mrb[0].mxu0
    %v292 = vadd.f32 %v195, %v291
    %v293 = vpop.f32.mrb[0].mxu0
    %294 = vmatprep.mubr.f32.mxu0 0.0
    %295 = vmatmul.mubr.f32.gmra.mrb[0].mxu0 %v215
    %v296 = vpop.f32.mrb[0].mxu0
    %v297 = vadd.f32 %v200, %v296
    %v298 = vpop.f32.mrb[0].mxu0
    %299 = vmatprep.mubr.f32.mxu0 0.0
    %300 = vmatmul.mubr.f32.gmra.mrb[0].mxu0 %v218
    %v301 = vpop.f32.mrb[0].mxu0
    %v302 = vadd.f32 %v205, %v301
    %v303 = vpop.f32.mrb[0].mxu0
    %304 = vdwg.mxu0
    %v305 = vtanh.pop %v287
    %v306 = vtanh.pop %v292
    %v307 = vtanh.pop %v297
    %v308 = vtanh.pop %v302
    %v309 = vld [vmem:[%s6] sm:$0x1]
    %v310 = vld [vmem:[#allocation2] sm:$0x1]
    %312 = vset.pattern.permute.xlu0 0
    %313 = vperm.xlu0 %312, %v310
    %v314 = vpop.permute.xlu0 %313
    %v316 = vlaneseq
    %v317 = vshrl.u32 %v316, 7
    %v318 = vsub.s32 0, %v317
    %v319 = vrot.slane %v314, %v318
    %v321 = vsel %vm207, %v309, 0
    %323 = vmatprep.subr.mxu0 0.0
    %324 = vmatpush1.msra.mxu0 %v305
    %325 = vmatprep.subr.mxu0 0.0
    %326 = vmatpush1.msra.mxu0 %v306
    %327 = vmatprep.subr.mxu0 0.0
    %328 = vmatpush1.msra.mxu0 %v307
    %329 = vmatprep.subr.mxu0 0.0
    %330 = vmatpush1.msra.mxu0 %v308
    %331 = vmatprep.subr.mxu0 0.0
    %332 = vmatpush1.msra.mxu0 0.0
    %333 = vmatprep.subr.mxu0 0.0
    %334 = vmatpush1.msra.mxu0 0.0
    %335 = vmatprep.subr.mxu0 0.0
    %336 = vmatpush1.msra.mxu0 0.0
    %337 = vmatprep.subr.mxu0 0.0
    %338 = vmatpush1.msra.mxu0 0.0
    %339 = vmatprep.subr.mxu0 0.0
    %340 = vmatpush1.msra.mxu0 0.0
    %341 = vmatprep.subr.mxu0 0.0
    %342 = vmatpush1.msra.mxu0 0.0
    %343 = vmatprep.subr.mxu0 0.0
    %344 = vmatpush1.msra.mxu0 0.0
    %345 = vmatprep.subr.mxu0 0.0
    %346 = vmatpush1.msra.mxu0 0.0
    %347 = vmatprep.subr.mxu0 0.0
    %348 = vmatpush1.msra.mxu0 0.0
    %349 = vmatprep.subr.mxu0 0.0
    %350 = vmatpush1.msra.mxu0 0.0
    %351 = vmatprep.subr.mxu0 0.0
    %352 = vmatpush1.msra.mxu0 0.0
    %353 = vmatprep.subr.mxu0 0.0
    %354 = vmatpush1.msra.mxu0 0.0
    %355 = vmatprep.subr.mxu0 0.0
    %356 = vmatpush1.msra.mxu0 0.0
    %357 = vmatprep.subr.mxu0 0.0
    %358 = vmatpush1.msra.mxu0 0.0
    %359 = vmatprep.subr.mxu0 0.0
    %360 = vmatpush1.msra.mxu0 0.0
    %361 = vmatprep.subr.mxu0 0.0
    %362 = vmatpush1.msra.mxu0 0.0
    %363 = vmatprep.subr.mxu0 0.0
    %364 = vmatpush1.msra.mxu0 0.0
    %365 = vmatprep.subr.mxu0 0.0
    %366 = vmatpush1.msra.mxu0 0.0
    %367 = vmatprep.subr.mxu0 0.0
    %368 = vmatpush1.msra.mxu0 0.0
    %369 = vmatprep.subr.mxu0 0.0
    %370 = vmatpush1.msra.mxu0 0.0
    %371 = vmatprep.subr.mxu0 0.0
    %372 = vmatpush1.msra.mxu0 0.0
    %373 = vmatprep.subr.mxu0 0.0
    %374 = vmatpush1.msra.mxu0 0.0
    %375 = vmatprep.subr.mxu0 0.0
    %376 = vmatpush1.msra.mxu0 0.0
    %377 = vmatprep.subr.mxu0 0.0
    %378 = vmatpush1.msra.mxu0 0.0
    %379 = vmatprep.subr.mxu0 0.0
    %380 = vmatpush1.msra.mxu0 0.0
    %381 = vmatprep.subr.mxu0 0.0
    %382 = vmatpush1.msra.mxu0 0.0
    %383 = vmatprep.subr.mxu0 0.0
    %384 = vmatpush1.msra.mxu0 0.0
    %385 = vmatprep.subr.mxu0 0.0
    %386 = vmatpush1.msra.mxu0 0.0
    %387 = vmatprep.mubr.f32.mxu0 0.0
    %388 = vmatmul.mubr.f32.gmra.mrb[0].mxu0 %v321
    %v389 = vpop.f32.mrb[0].mxu0
    %v390 = vadd.f32 %v319, %v389
    %v391 = vpop.f32.mrb[0].mxu0
    %392 = vdwg.mxu0
    %v393 = vmul.f32 %v390, 1.442695
    %v394 = vpow.pop %v393
    %s395 = sld [smem:[#allocation3]]
    %s396 = sld [smem:[#allocation3 + $0x1]]
    %s397 = sld [smem:[#allocation3 + $0x2]]
    %v398 = vrot.slane %v44, 6
    %v400 = vsub.f32 %v44, %v398
    %v401 = vstv %s395
    %v402 = vmul.f32 %v44, %v401
    %v404 = vrot.slane %v402, 7
    %v406 = vsub.f32 %v400, %v404
    %v408 = vrot.slane %v394, 5
    %v410 = vmul.f32 %v406, %v408
    %v411 = vrot.slane %v44, 2
    %v413 = vsub.f32 %v44, %v411
    %v414 = vstv %s396
    %v415 = vmul.f32 %v413, %v414
    %v416 = vstv %s397
    %v417 = vmul.f32 %v44, %v416
    %v419 = vrot.slane %v417, 3
    %v421 = vsub.f32 %v415, %v419
    %v422 = vlaneseq
    %v423 = vshrl.u32 %v422, 7
    %vm424 = vcmp.eq.s32.totalorder %v423, 0
    %v425 = vsel %vm424, 1, 0
    %vm426 = vcmp.eq.s32.totalorder %v425, 1
    %v427 = vlaneseq
    %v428 = vshrl.u32 %v427, 7
    %v429 = vsub.s32 3, %v428
    %v430 = vrot.slane %v410, %v429
    %v431 = vlaneseq
    %v432 = vshrl.u32 %v431, 7
    %v433 = vsub.s32 0, %v432
    %v434 = vrot.slane %v421, %v433
    %v435 = vsel %vm426, %v430, %v434
    %436 = vst [vmem:[%s8] sm:$0x3] %v435
    // Predicated region
    $region38: #{greybox_ode1_forward.1} parent=1 // pred_check
      _
    $region39: #{greybox_ode1_forward.1} parent=1 // pred_check_branch
      %438 = sbr.rel (0) target = $region41
    $region40: #{greybox_ode1_forward.1} parent=1 // pred_region
      _
    $region41: #{greybox_ode1_forward.1} parent=1 // pred_fallthru
      _
    // Predicated region
    $region42: #{greybox_ode1_forward.1} parent=1 // pred_check
      _
    $region43: #{greybox_ode1_forward.1} parent=1 // pred_check_branch
      %440 = sbr.rel (0) target = $region45
    $region44: #{greybox_ode1_forward.1} parent=1 // pred_region
      _
    $region45: #{greybox_ode1_forward.1} parent=1 // pred_fallthru
      _
    %441 = vsyncpa [#allocation4], 1

</llo_original>
